<compile_context>
chip_gen: v7x
topology: tpu7x:2x2x1
jax: 0.10.0
libtpu: 0.0.40
codegen_flags: <defaults>
</compile_context>

<pallas_src>
import functools

import jax
import jax.numpy as jnp
from jax.experimental import pallas as pl
from jax.experimental.pallas import tpu as pltpu


_NEG_BIG = -1.0e30     # finite "-inf": keeps alpha / rescale math NaN-free
_STAT_LANES = 128      # lane-replicated width for logp/entropy outputs


def _round_up(x, m):
    return ((x + m - 1) // m) * m


def _policy_head_kernel(h_ref, w_ref, lbl_ref, *refs,
                        tile_m, tile_n, v_true, mask_vocab, write_logits):
    """Grid = (row tiles i [parallel], vocab tiles j [arbitrary, innermost])."""
    if write_logits:
        logits_ref, logp_ref, ent_ref, m_s, z_s, s_s, sel_s = refs
    else:
        logp_ref, ent_ref, m_s, z_s, s_s, sel_s = refs

    j = pl.program_id(1)

    @pl.when(j == 0)
    def _init():
        m_s[...] = jnp.full_like(m_s, _NEG_BIG)
        z_s[...] = jnp.zeros_like(z_s)
        s_s[...] = jnp.zeros_like(s_s)
        sel_s[...] = jnp.zeros_like(sel_s)

    # MXU: (TM, H) bf16 @ (H, TN) bf16 -> (TM, TN) f32. 1/temperature is
    # pre-folded into w_ref on the host (cached), so no per-tile VPU scale.
    logits = jnp.dot(h_ref[...], w_ref[...], preferred_element_type=jnp.float32)
    if write_logits:
        logits_ref[...] = logits.astype(logits_ref.dtype)

    # Global vocab column index for this tile (label gather + vocab-pad mask).
    col = j * tile_n + jax.lax.broadcasted_iota(jnp.int32, (tile_m, tile_n), 1)
    if mask_vocab:
        logits = jnp.where(col < v_true, logits, _NEG_BIG)

    # --- online softmax accumulation across vocab tiles -----------------
    m_prev = m_s[...]                                            # (TM, 1)
    z_prev = z_s[...]
    s_prev = s_s[...]
    m_new = jnp.maximum(m_prev, jnp.max(logits, axis=-1, keepdims=True))
    alpha = jnp.exp(m_prev - m_new)                              # rescale factor
    lm = logits - m_new                                          # (TM, TN)
    e = jnp.exp(lm)                                              # (TM, TN)
    m_s[...] = m_new
    z_s[...] = alpha * z_prev + jnp.sum(e, axis=-1, keepdims=True)
    # s = sum e*(l-m)  (stable entropy form; rebase old sum to the new max)
    s_s[...] = (alpha * (s_prev + (m_prev - m_new) * z_prev)
                + jnp.sum(e * lm, axis=-1, keepdims=True))

    # Label logit gather, fused into the same streamed pass over this tile.
    lbl = lbl_ref[...]                                           # (TM, 1) int32
    sel_s[...] = sel_s[...] + jnp.sum(
        jnp.where(col == lbl, logits, 0.0), axis=-1, keepdims=True)

    @pl.when(j == pl.num_programs(1) - 1)
    def _finalize():
        z = z_s[...]
        log_z = jnp.log(z)
        inv_z = pl.reciprocal(z, approx=True)                    # EUP slot
        ent = log_z - s_s[...] * inv_z                           # (TM, 1)
        logp = sel_s[...] - (m_s[...] + log_z)                   # (TM, 1)
        # Lane-dense stores: replicate the column across 128 lanes so the
        # store path uses full unmasked vst (wrapper takes column 0).
        ent_ref[...] = jnp.broadcast_to(ent, (tile_m, _STAT_LANES))
        logp_ref[...] = jnp.broadcast_to(logp, (tile_m, _STAT_LANES))


@functools.partial(jax.jit,
                   static_argnames=("tile_m", "tile_n", "return_logits",
                                    "logits_dtype"))
def policy_head(hidden_rows, w_scaled, labels_col, *, tile_m=None, tile_n=None,
                return_logits=True, logits_dtype=jnp.bfloat16):
    """hidden_rows: [R, H]; w_scaled: [H, V] (already / temperature); labels: [R, 1]."""
    R, H = hidden_rows.shape
    Hw, V = w_scaled.shape
    assert H == Hw

    if tile_m is None:
        # Don't pad tiny batches up to 128 rows; bf16 sublane packing is 16.
        tile_m = min(128, _round_up(R, 16))
    if tile_n is None:
        # v7x (64 MiB VMEM/TC): keep tile_n <= ~2048; v6e/v5e can raise it.
        tile_n = min(_round_up(V, 128), 2048)
    tile_n = _round_up(tile_n, 128)

    r_pad = _round_up(R, tile_m)
    v_pad = _round_up(V, tile_n)
    grid = (r_pad // tile_m, v_pad // tile_n)

    h_bf = hidden_rows.astype(jnp.bfloat16)
    w_bf = w_scaled.astype(jnp.bfloat16)
    lbl = labels_col.astype(jnp.int32)
    if r_pad != R:
        h_bf = jnp.pad(h_bf, ((0, r_pad - R), (0, 0)))
        lbl = jnp.pad(lbl, ((0, r_pad - R), (0, 0)))
    if v_pad != V:
        w_bf = jnp.pad(w_bf, ((0, 0), (0, v_pad - V)))

    kernel = functools.partial(
        _policy_head_kernel, tile_m=tile_m, tile_n=tile_n, v_true=V,
        mask_vocab=(v_pad != V), write_logits=return_logits)

    out_shapes, out_specs = [], []
    if return_logits:
        out_shapes.append(jax.ShapeDtypeStruct((r_pad, v_pad), logits_dtype))
        out_specs.append(pl.BlockSpec((tile_m, tile_n), lambda i, j: (i, j)))
    out_shapes += [jax.ShapeDtypeStruct((r_pad, _STAT_LANES), jnp.float32),
                   jax.ShapeDtypeStruct((r_pad, _STAT_LANES), jnp.float32)]
    out_specs += [pl.BlockSpec((tile_m, _STAT_LANES), lambda i, j: (i, 0)),
                  pl.BlockSpec((tile_m, _STAT_LANES), lambda i, j: (i, 0))]

    # VMEM budget: double-buffered bf16 blocks (h, W, logits out) + f32
    # temporaries + stats.  Explicit because v5e's scoped default is 16 MiB;
    # capped well under v7x's 64 MiB/TC.
    est = (2 * tile_m * H * 2 + 2 * H * tile_n * 2
           + (2 * tile_m * tile_n * 2 if return_logits else 0)
           + 8 * tile_m * tile_n * 4
           + 8 * tile_m * _STAT_LANES * 4
           + (1 << 20))
    vmem_limit = int(min(max(est, 16 * 1024 * 1024), 56 * 1024 * 1024))

    cost = pl.CostEstimate(
        flops=2 * r_pad * H * v_pad,
        transcendentals=2 * r_pad * v_pad,
        bytes_accessed=(r_pad * H * 2 + H * v_pad * 2 + r_pad * 4
                        + (r_pad * v_pad * 2 if return_logits else 0)
                        + 2 * r_pad * _STAT_LANES * 4))

    outs = pl.pallas_call(
        kernel,
        out_shape=tuple(out_shapes),
        grid_spec=pltpu.PrefetchScalarGridSpec(
            num_scalar_prefetch=0,
            grid=grid,
            in_specs=[
                pl.BlockSpec((tile_m, H), lambda i, j: (i, 0)),   # hidden rows
                pl.BlockSpec((H, tile_n), lambda i, j: (0, j)),   # W vocab tile
                pl.BlockSpec((tile_m, 1), lambda i, j: (i, 0)),   # labels
            ],
            out_specs=out_specs,
            scratch_shapes=[pltpu.VMEM((tile_m, 1), jnp.float32)] * 4,
        ),
        compiler_params=pltpu.CompilerParams(
            dimension_semantics=("parallel", "arbitrary"),
            vmem_limit_bytes=vmem_limit,
        ),
        cost_estimate=cost,
    )(h_bf, w_bf, lbl)

    if return_logits:
        logits_p, logp_p, ent_p = outs
        logits = logits_p[:R, :V]
    else:
        logp_p, ent_p = outs
        logits = None
    return logits, logp_p[:R, 0], ent_p[:R, 0]


class PolicyPallas:
    """JAX/Pallas counterpart of the RLHF Policy (concrete autoregressive variant)."""

    def __init__(self, vocab_size=256, hidden_size=32, response_len=8, seed=0,
                 tile_m=None, tile_n=None):
        self.vocab_size = vocab_size
        self.hidden_size = hidden_size
        self.response_len = response_len
        self.tile_m = tile_m
        self.tile_n = tile_n
        k0, k1, k2, k3 = jax.random.split(jax.random.PRNGKey(seed), 4)
        # Deterministic synthetic "base model" parameters.
        self.embed = jax.random.normal(k0, (vocab_size, hidden_size), jnp.float32) * 0.02
        self.w_mix = jax.random.normal(k1, (hidden_size, hidden_size), jnp.float32) * 0.1
        self.b_mix = jax.random.normal(k2, (hidden_size,), jnp.float32) * 0.01
        self.w_lm = jax.random.normal(k3, (hidden_size, vocab_size), jnp.float32) * 0.05
        self._w_scaled_cache = {}

    def _scaled_weight(self, temperature):
        key = float(temperature)
        w = self._w_scaled_cache.get(key)
        if w is None:
            # One-time f32 read + bf16 write of the weight per temperature.
            w = (self.w_lm * jnp.float32(1.0 / key)).astype(jnp.bfloat16)
            self._w_scaled_cache[key] = w
        return w

    def forward(self, queries, query_attn_masks, responses, images=None,
                temperature=None, return_logits=True):
        del query_attn_masks, images   # unused by the synthetic base model
        if temperature is None:
            temperature = 1.0
        B = queries.shape[0]
        T = self.response_len
        V = self.vocab_size
        H = self.hidden_size

        # Glue (plain JAX): concat, embed, tiny per-token mixing layer.
        input_ids = jnp.concatenate([queries, responses], axis=1)        # [B, L]
        x = self.embed[input_ids]                                        # [B, L, H]
        h = jnp.tanh(x @ self.w_mix + self.b_mix)                        # [B, L, H]

        hidden = h[:, -T - 1:-1, :]                                      # [B, T, H]
        labels = input_ids[:, -T:]                                       # [B, T]

        hidden_rows = hidden.reshape(B * T, H)                           # f32 already
        labels_col = labels.reshape(B * T, 1).astype(jnp.int32)

        logits_rows, logp_rows, ent_rows = policy_head(
            hidden_rows, self._scaled_weight(temperature), labels_col,
            tile_m=self.tile_m, tile_n=self.tile_n,
            return_logits=return_logits)

        out = dict(
            logprobs=logp_rows.reshape(B, T),
            entropies=ent_rows.reshape(B, T),
            last_hidden_state=hidden,
        )
        if return_logits:
            # bf16, already divided by temperature (bandwidth-saving writeback).
            out["logits"] = logits_rows.reshape(B, T, V)
        return out


if __name__ == "__main__":
    B, Q_LEN, T_RESP, H, V = 3, 8, 8, 32, 256
    # tile_m=16 / tile_n=128 exercise both grid axes (row pad 24->32, 2 vocab
    # tiles) and the online-softmax accumulation at these tiny demo shapes.
    policy = PolicyPallas(vocab_size=V, hidden_size=H, response_len=T_RESP,
                          seed=0, tile_m=16, tile_n=128)

    key = jax.random.PRNGKey(0)
    kq, kr = jax.random.split(key)
    queries = jax.random.randint(kq, (B, Q_LEN), 0, V, dtype=jnp.int32)
    responses = jax.random.randint(kr, (B, T_RESP), 0, V, dtype=jnp.int32)
    query_attn_masks = jnp.ones((B, Q_LEN), dtype=jnp.int32)

    temperature = 0.7
    out = policy.forward(queries, query_attn_masks, responses, temperature=temperature)
    jax.block_until_ready(out)

    # Pure-JAX reference mirroring the kernel's numerics (bf16 operands,
    # temperature folded into the weight, f32 accumulation).
    input_ids = jnp.concatenate([queries, responses], axis=1)
    x = policy.embed[input_ids]
    h = jnp.tanh(x @ policy.w_mix + policy.b_mix)
    hidden = h[:, -T_RESP - 1:-1, :]
    labels = input_ids[:, -T_RESP:]

    w_scaled = (policy.w_lm * (1.0 / temperature)).astype(jnp.bfloat16)
    ref_logits = jnp.einsum(
        "bth,hv->btv", hidden.astype(jnp.bfloat16), w_scaled,
        preferred_element_type=jnp.float32)
    ref_logp_all = jax.nn.log_softmax(ref_logits, axis=-1)
    ref_logprobs = jnp.take_along_axis(ref_logp_all, labels[..., None], axis=-1)[..., 0]
    ref_ent = -jnp.sum(jnp.exp(ref_logp_all) * ref_logp_all, axis=-1)

    assert jnp.allclose(out["logits"].astype(jnp.float32), ref_logits,
                        atol=3e-2, rtol=3e-2), "logits mismatch"
    assert jnp.allclose(out["logprobs"], ref_logprobs, atol=1e-2, rtol=1e-2), "logprobs mismatch"
    assert jnp.allclose(out["entropies"], ref_ent, atol=1e-2, rtol=1e-2), "entropies mismatch"

    # Logits-free PPO path (skips the dominant HBM writeback) must agree.
    out2 = policy.forward(queries, query_attn_masks, responses,
                          temperature=temperature, return_logits=False)
    jax.block_until_ready(out2)
    assert "logits" not in out2
    assert jnp.allclose(out2["logprobs"], out["logprobs"], atol=1e-6), "no-logits logprobs mismatch"
    assert jnp.allclose(out2["entropies"], out["entropies"], atol=1e-6), "no-logits entropies mismatch"

    print("KERNEL_OK")
</pallas_src>

<mosaic_0001>
module attributes {stable_mosaic.version = 11 : i64} {
  func.func @_policy_head_kernel(%arg0: i32, %arg1: i32, %arg2: memref<16x32xbf16, #tpu.memory_space<vmem>>, %arg3: memref<32x128xbf16, #tpu.memory_space<vmem>>, %arg4: memref<16x1xi32, #tpu.memory_space<vmem>>, %arg5: memref<16x128xbf16, #tpu.memory_space<vmem>>, %arg6: memref<16x128xf32, #tpu.memory_space<vmem>>, %arg7: memref<16x128xf32, #tpu.memory_space<vmem>>, %arg8: memref<16x1xf32, #tpu.memory_space<vmem>>, %arg9: memref<16x1xf32, #tpu.memory_space<vmem>>, %arg10: memref<16x1xf32, #tpu.memory_space<vmem>>, %arg11: memref<16x1xf32, #tpu.memory_space<vmem>>) attributes {dimension_semantics = [#tpu.dimension_semantics<parallel>, #tpu.dimension_semantics<arbitrary>], iteration_bounds = array<i64: 2, 2>, scalar_prefetch = 0 : i64, scratch_operands = 4 : i64, tpu.core_type = #tpu.core_type<tc>, window_params = [{transform_indices = @transform_0, window_bounds = array<i64: 16, 32>}, {transform_indices = @transform_1, window_bounds = array<i64: 32, 128>}, {transform_indices = @transform_2, window_bounds = array<i64: 16, 1>}, {transform_indices = @transform_3, window_bounds = array<i64: 16, 128>}, {transform_indices = @transform_4, window_bounds = array<i64: 16, 128>}, {transform_indices = @transform_5, window_bounds = array<i64: 16, 128>}]} {
    %c0_i32 = arith.constant 0 : i32
    %0 = arith.cmpi eq, %arg1, %c0_i32 : i32
    %1 = arith.extui %0 : i1 to i32
    %c0_i32_0 = arith.constant 0 : i32
    %2 = arith.cmpi ne, %1, %c0_i32_0 : i32
    scf.if %2 {
      %cst_30 = arith.constant -1.000000e+30 : f32
      %51 = vector.broadcast %cst_30 : f32 to vector<16x1xf32>
      %c0_31 = arith.constant 0 : index
      %c0_32 = arith.constant 0 : index
      %52 = vector.load %arg8[%c0_31, %c0_32] : memref<16x1xf32, #tpu.memory_space<vmem>>, vector<16x1xf32>
      tpu.vector_store %arg8[%c0_31, %c0_32], %51 {strides = array<i32>} : memref<16x1xf32, #tpu.memory_space<vmem>>, vector<16x1xf32>,
      %cst_33 = arith.constant 0.000000e+00 : f32
      %53 = vector.broadcast %cst_33 : f32 to vector<16x1xf32>
      %c0_34 = arith.constant 0 : index
      %c0_35 = arith.constant 0 : index
      %54 = vector.load %arg9[%c0_34, %c0_35] : memref<16x1xf32, #tpu.memory_space<vmem>>, vector<16x1xf32>
      tpu.vector_store %arg9[%c0_34, %c0_35], %53 {strides = array<i32>} : memref<16x1xf32, #tpu.memory_space<vmem>>, vector<16x1xf32>,
      %cst_36 = arith.constant 0.000000e+00 : f32
      %55 = vector.broadcast %cst_36 : f32 to vector<16x1xf32>
      %c0_37 = arith.constant 0 : index
      %c0_38 = arith.constant 0 : index
      %56 = vector.load %arg10[%c0_37, %c0_38] : memref<16x1xf32, #tpu.memory_space<vmem>>, vector<16x1xf32>
      tpu.vector_store %arg10[%c0_37, %c0_38], %55 {strides = array<i32>} : memref<16x1xf32, #tpu.memory_space<vmem>>, vector<16x1xf32>,
      %cst_39 = arith.constant 0.000000e+00 : f32
      %57 = vector.broadcast %cst_39 : f32 to vector<16x1xf32>
      %c0_40 = arith.constant 0 : index
      %c0_41 = arith.constant 0 : index
      %58 = vector.load %arg11[%c0_40, %c0_41] : memref<16x1xf32, #tpu.memory_space<vmem>>, vector<16x1xf32>
      tpu.vector_store %arg11[%c0_40, %c0_41], %57 {strides = array<i32>} : memref<16x1xf32, #tpu.memory_space<vmem>>, vector<16x1xf32>,
    } else {
    }
    %c0 = arith.constant 0 : index
    %c0_1 = arith.constant 0 : index
    %3 = vector.load %arg2[%c0, %c0_1] : memref<16x32xbf16, #tpu.memory_space<vmem>>, vector<16x32xbf16>
    %c0_2 = arith.constant 0 : index
    %c0_3 = arith.constant 0 : index
    %4 = vector.load %arg3[%c0_2, %c0_3] : memref<32x128xbf16, #tpu.memory_space<vmem>>, vector<32x128xbf16>
    %cst = arith.constant dense<0.000000e+00> : vector<16x128xf32>
    %5 = tpu.matmul %3, %4, %cst {dimension_numbers = #tpu.dot_dimension_numbers<[1], [0], [0], [1], [0, 0, 1, 1], [], []>} : vector<16x32xbf16>, vector<32x128xbf16>, vector<16x128xf32> -> vector<16x128xf32>
    %6 = arith.truncf %5 : vector<16x128xf32> to vector<16x128xbf16>
    %c0_4 = arith.constant 0 : index
    %c0_5 = arith.constant 0 : index
    %7 = vector.load %arg5[%c0_4, %c0_5] : memref<16x128xbf16, #tpu.memory_space<vmem>>, vector<16x128xbf16>
    tpu.vector_store %arg5[%c0_4, %c0_5], %6 {strides = array<i32>} : memref<16x128xbf16, #tpu.memory_space<vmem>>, vector<16x128xbf16>,
    %c128_i32 = arith.constant 128 : i32
    %8 = arith.muli %arg1, %c128_i32 : i32
    %9 = tpu.iota {dimensions = array<i32: 1>} : vector<16x128xi32>
    %10 = vector.broadcast %8 : i32 to vector<16x128xi32>
    %11 = arith.addi %10, %9 : vector<16x128xi32>
    %c0_6 = arith.constant 0 : index
    %c0_7 = arith.constant 0 : index
    %12 = vector.load %arg8[%c0_6, %c0_7] : memref<16x1xf32, #tpu.memory_space<vmem>>, vector<16x1xf32>
    %c0_8 = arith.constant 0 : index
    %c0_9 = arith.constant 0 : index
    %13 = vector.load %arg9[%c0_8, %c0_9] : memref<16x1xf32, #tpu.memory_space<vmem>>, vector<16x1xf32>
    %c0_10 = arith.constant 0 : index
    %c0_11 = arith.constant 0 : index
    %14 = vector.load %arg10[%c0_10, %c0_11] : memref<16x1xf32, #tpu.memory_space<vmem>>, vector<16x1xf32>
    %cst_12 = arith.constant dense<0xFF800000> : vector<16xf32>
    %15 = vector.multi_reduction <maximumf>, %5, %cst_12 [1] : vector<16x128xf32> to vector<16xf32>
    %16 = vector.shape_cast %15 : vector<16xf32> to vector<16x1xf32>
    %17 = arith.maximumf %12, %16 : vector<16x1xf32>
    %18 = arith.subf %12, %17 : vector<16x1xf32>
    %19 = math.exp %18 : vector<16x1xf32>
    %20 = vector.broadcast %17 : vector<16x1xf32> to vector<16x128xf32>
    %21 = arith.subf %5, %20 : vector<16x128xf32>
    %22 = math.exp %21 : vector<16x128xf32>
    %c0_13 = arith.constant 0 : index
    %c0_14 = arith.constant 0 : index
    %23 = vector.load %arg8[%c0_13, %c0_14] : memref<16x1xf32, #tpu.memory_space<vmem>>, vector<16x1xf32>
    tpu.vector_store %arg8[%c0_13, %c0_14], %17 {strides = array<i32>} : memref<16x1xf32, #tpu.memory_space<vmem>>, vector<16x1xf32>,
    %24 = arith.mulf %19, %13 : vector<16x1xf32>
    %cst_15 = arith.constant dense<0.000000e+00> : vector<16xf32>
    %25 = vector.multi_reduction <add>, %22, %cst_15 [1] : vector<16x128xf32> to vector<16xf32>
    %26 = vector.shape_cast %25 : vector<16xf32> to vector<16x1xf32>
    %27 = arith.addf %24, %26 : vector<16x1xf32>
    %c0_16 = arith.constant 0 : index
    %c0_17 = arith.constant 0 : index
    %28 = vector.load %arg9[%c0_16, %c0_17] : memref<16x1xf32, #tpu.memory_space<vmem>>, vector<16x1xf32>
    tpu.vector_store %arg9[%c0_16, %c0_17], %27 {strides = array<i32>} : memref<16x1xf32, #tpu.memory_space<vmem>>, vector<16x1xf32>,
    %29 = arith.subf %12, %17 : vector<16x1xf32>
    %30 = arith.mulf %29, %13 : vector<16x1xf32>
    %31 = arith.addf %14, %30 : vector<16x1xf32>
    %32 = arith.mulf %19, %31 : vector<16x1xf32>
    %33 = arith.mulf %22, %21 : vector<16x128xf32>
    %cst_18 = arith.constant dense<0.000000e+00> : vector<16xf32>
    %34 = vector.multi_reduction <add>, %33, %cst_18 [1] : vector<16x128xf32> to vector<16xf32>
    %35 = vector.shape_cast %34 : vector<16xf32> to vector<16x1xf32>
    %36 = arith.addf %32, %35 : vector<16x1xf32>
    %c0_19 = arith.constant 0 : index
    %c0_20 = arith.constant 0 : index
    %37 = vector.load %arg10[%c0_19, %c0_20] : memref<16x1xf32, #tpu.memory_space<vmem>>, vector<16x1xf32>
    tpu.vector_store %arg10[%c0_19, %c0_20], %36 {strides = array<i32>} : memref<16x1xf32, #tpu.memory_space<vmem>>, vector<16x1xf32>,
    %c0_21 = arith.constant 0 : index
    %c0_22 = arith.constant 0 : index
    %38 = vector.load %arg4[%c0_21, %c0_22] : memref<16x1xi32, #tpu.memory_space<vmem>>, vector<16x1xi32>
    %c0_23 = arith.constant 0 : index
    %c0_24 = arith.constant 0 : index
    %39 = vector.load %arg11[%c0_23, %c0_24] : memref<16x1xf32, #tpu.memory_space<vmem>>, vector<16x1xf32>
    %40 = vector.broadcast %38 : vector<16x1xi32> to vector<16x128xi32>
    %41 = arith.cmpi eq, %11, %40 : vector<16x128xi32>
    %cst_25 = arith.constant 0.000000e+00 : f32
    %42 = vector.broadcast %cst_25 : f32 to vector<16x128xf32>
    %43 = arith.select %41, %5, %42 : vector<16x128xi1>, vector<16x128xf32>
    %cst_26 = arith.constant dense<0.000000e+00> : vector<16xf32>
    %44 = vector.multi_reduction <add>, %43, %cst_26 [1] : vector<16x128xf32> to vector<16xf32>
    %45 = vector.shape_cast %44 : vector<16xf32> to vector<16x1xf32>
    %46 = arith.addf %39, %45 : vector<16x1xf32>
    %c0_27 = arith.constant 0 : index
    %c0_28 = arith.constant 0 : index
    %47 = vector.load %arg11[%c0_27, %c0_28] : memref<16x1xf32, #tpu.memory_space<vmem>>, vector<16x1xf32>
    tpu.vector_store %arg11[%c0_27, %c0_28], %46 {strides = array<i32>} : memref<16x1xf32, #tpu.memory_space<vmem>>, vector<16x1xf32>,
    %c1_i32 = arith.constant 1 : i32
    %48 = arith.cmpi eq, %arg1, %c1_i32 : i32
    %49 = arith.extui %48 : i1 to i32
    %c0_i32_29 = arith.constant 0 : i32
    %50 = arith.cmpi ne, %49, %c0_i32_29 : i32
    scf.if %50 {
      %c0_30 = arith.constant 0 : index
      %c0_31 = arith.constant 0 : index
      %51 = vector.load %arg9[%c0_30, %c0_31] : memref<16x1xf32, #tpu.memory_space<vmem>>, vector<16x1xf32>
      %52 = math.log %51 : vector<16x1xf32>
      %53 = tpu.reciprocal %51 {approx = true} : vector<16x1xf32> -> vector<16x1xf32>
      %c0_32 = arith.constant 0 : index
      %c0_33 = arith.constant 0 : index
      %54 = vector.load %arg10[%c0_32, %c0_33] : memref<16x1xf32, #tpu.memory_space<vmem>>, vector<16x1xf32>
      %55 = arith.mulf %54, %53 : vector<16x1xf32>
      %56 = arith.subf %52, %55 : vector<16x1xf32>
      %c0_34 = arith.constant 0 : index
      %c0_35 = arith.constant 0 : index
      %57 = vector.load %arg11[%c0_34, %c0_35] : memref<16x1xf32, #tpu.memory_space<vmem>>, vector<16x1xf32>
      %c0_36 = arith.constant 0 : index
      %c0_37 = arith.constant 0 : index
      %58 = vector.load %arg8[%c0_36, %c0_37] : memref<16x1xf32, #tpu.memory_space<vmem>>, vector<16x1xf32>
      %59 = arith.addf %58, %52 : vector<16x1xf32>
      %60 = arith.subf %57, %59 : vector<16x1xf32>
      %61 = vector.shape_cast %56 : vector<16x1xf32> to vector<16x1xf32>
      %62 = vector.broadcast %61 : vector<16x1xf32> to vector<16x128xf32>
      %c0_38 = arith.constant 0 : index
      %c0_39 = arith.constant 0 : index
      %63 = vector.load %arg7[%c0_38, %c0_39] : memref<16x128xf32, #tpu.memory_space<vmem>>, vector<16x128xf32>
      tpu.vector_store %arg7[%c0_38, %c0_39], %62 {strides = array<i32>} : memref<16x128xf32, #tpu.memory_space<vmem>>, vector<16x128xf32>,
      %64 = vector.shape_cast %60 : vector<16x1xf32> to vector<16x1xf32>
      %65 = vector.broadcast %64 : vector<16x1xf32> to vector<16x128xf32>
      %c0_40 = arith.constant 0 : index
      %c0_41 = arith.constant 0 : index
      %66 = vector.load %arg6[%c0_40, %c0_41] : memref<16x128xf32, #tpu.memory_space<vmem>>, vector<16x128xf32>
      tpu.vector_store %arg6[%c0_40, %c0_41], %65 {strides = array<i32>} : memref<16x128xf32, #tpu.memory_space<vmem>>, vector<16x128xf32>,
    } else {
    }
    return
  }
  func.func @transform_0(%arg0: i32, %arg1: i32) -> (i32, i32) {
    %c0_i32 = arith.constant 0 : i32
    %c0_i32_0 = arith.constant 0 : i32
    return %arg0, %c0_i32 : i32, i32
  }
  func.func @transform_1(%arg0: i32, %arg1: i32) -> (i32, i32) {
    %c0_i32 = arith.constant 0 : i32
    %c0_i32_0 = arith.constant 0 : i32
    return %c0_i32, %arg1 : i32, i32
  }
  func.func @transform_2(%arg0: i32, %arg1: i32) -> (i32, i32) {
    %c0_i32 = arith.constant 0 : i32
    %c0_i32_0 = arith.constant 0 : i32
    return %arg0, %c0_i32 : i32, i32
  }
  func.func @transform_3(%arg0: i32, %arg1: i32) -> (i32, i32) {
    %c0_i32 = arith.constant 0 : i32
    return %arg0, %arg1 : i32, i32
  }
  func.func @transform_4(%arg0: i32, %arg1: i32) -> (i32, i32) {
    %c0_i32 = arith.constant 0 : i32
    %c0_i32_0 = arith.constant 0 : i32
    return %arg0, %c0_i32 : i32, i32
  }
  func.func @transform_5(%arg0: i32, %arg1: i32) -> (i32, i32) {
    %c0_i32 = arith.constant 0 : i32
    %c0_i32_0 = arith.constant 0 : i32
    return %arg0, %c0_i32 : i32, i32
  }
}

</mosaic_0001>

<llo_original>
// kernel: policy_head.1
$region0: #{policy_head.1}
  #allocation0 [shape = 'u32[]', space=smem, size = 0x4, offset = 0x4, fixed_abs, tag = 'smem constant byte address 0x4 - core index']
  #allocation1 [shape = 'u32[144,128]{1,0:T(1,128)}', space=vmem, size = 0x12000, scoped, tag = 'internal scratch']
  #allocation2 [shape = 'f32[16,1]{1,0:T(8,128)}', space=vmem, size = 0x2000, scoped, tag = 'scratch operand']
  #allocation3 [shape = 'f32[16,1]{1,0:T(8,128)}', space=vmem, size = 0x2000, scoped, tag = 'scratch operand']
  #allocation4 [shape = 'f32[16,1]{1,0:T(8,128)}', space=vmem, size = 0x2000, scoped, tag = 'scratch operand']
  #allocation5 [shape = 'f32[16,1]{1,0:T(8,128)}', space=vmem, size = 0x2000, scoped, tag = 'scratch operand']
  %s0 = inlined_call_operand.vmem [shape: bf16[32,32], index: 0, kind: input, shape index: {}]
  %s1 = inlined_call_operand.vmem [shape: bf16[32,256], index: 1, kind: input, shape index: {}]
  %s2 = inlined_call_operand.vmem [shape: s32[32,1], index: 2, kind: input, shape index: {}]
  %s3 = inlined_call_operand.vmem [shape: bf16[32,256], index: 3, kind: output, shape index: {0}]
  %s4 = inlined_call_operand.vmem [shape: f32[32,128], index: 4, kind: output, shape index: {1}]
  %s5 = inlined_call_operand.vmem [shape: f32[32,128], index: 5, kind: output, shape index: {2}]
  %6 = xla_tuple %s3, %s4, %s5
  %s7 = sld [smem:[#allocation0]]
  $region147: #{policy_head.1} parent=0
    _
  %s9 = ssub.s32 1, %s7
  %s10 = scalar_select 0, %s9, %s7
  $region1: #{policy_head.1} parent=0
    #allocation6 [shape = 'u8[16384]{0}', space=vmem, size = 0x4000, scoped, tag = 'input window, operand 1']
    #allocation7 [shape = 'u8[8192]{0}', space=vmem, size = 0x2000, scoped, tag = 'output window, operand 0']
    loop: start=0, step=1, limit=6
    $region2: #{policy_head.1} parent=1 // loop_pre_header
      _
    $region3: #{policy_head.1} parent=1 // loop_header
      %s12 = sphi 0, %s16
      %p13 = scmp.ge.s32.totalorder %s12, 6
      %s19 = sphi 0, %s31
      %s20 = sphi 0, %s27
      %s21 = sphi 0, %s19
      %s22 = sphi 0, %s20
      %s23 = sphi 0, %s21
      %s24 = sphi 0, %s22
      %s34 = sphi 0, %s36
      %s37 = sphi 0, %s34
      %s38 = sphi 0, %s37
      %s54 = sphi 0, %s38
      %s60 = sphi 0, %s62
      %s63 = sphi 0, %s60
      %s64 = sphi 0, %s63
      %s80 = sphi 0, %s64
      %s86 = sphi 0, %s88
      %s89 = sphi 0, %s86
      %s90 = sphi 0, %s89
      %s106 = sphi 0, %s90
      %s114 = sphi 0, %s116
      %s117 = sphi 0, %s114
      %s118 = sphi 0, %s117
      %s134 = sphi 0, %s118
      %s140 = sphi 0, %s142
      %s143 = sphi 0, %s140
      %s144 = sphi 0, %s143
      %s160 = sphi 0, %s144
      %s166 = sphi 0, %s168
      %s169 = sphi 0, %s166
      %s170 = sphi 0, %s169
      %s186 = sphi 0, %s170
    $region4: #{policy_head.1} parent=1 // loop_header_branch
      %15 = sbr.rel (%p13) target = $region8
    $region5: #{policy_head.1} parent=1 // loop_body
      %s17 = ssub.s32 %s12, 1
      %s18 = ssub.s32 %s12, 2
      %s25 = sadd.s32 1, %s20
      %p26 = scmp.ge.s32.totalorder %s25, 2
      %s27 = scalar_select %p26, 0, %s25
      %s28 = sadd.s32 1, %s19
      %s29 = scalar_select %p26, %s28, %s19
      %p30 = scmp.ge.s32.totalorder %s29, 2
      %s31 = scalar_select %p30, 0, %s29
      %s32 = ssub.s32 %s19, %s31
      %p33 = scmp.eq.s32.totalorder %s32, 0
      %s35 = sadd.s32 %s34, 1
      %s36 = scalar_select %p33, %s34, %s35
      %p39 = pneg %p33
      %p40 = scmp.eq.s32.totalorder %s12, 3
      %p41 = por %p39, %p40
      %p42 = scmp.ne.s32.totalorder %s34, %s37
      %p43 = scmp.eq.s32.totalorder %s12, 0
      %p44 = por %p42, %p43
      %p45 = scmp.ne.s32.totalorder %s34, %s37
      %p46 = scmp.eq.s32.totalorder %s17, 3
      %p47 = por %p45, %p46
      %p48 = scmp.ne.s32.totalorder %s37, %s38
      %p49 = scmp.eq.s32.totalorder %s17, 0
      %p50 = por %p48, %p49
      %p51 = scmp.ne.s32.totalorder %s37, %s38
      %p52 = scmp.eq.s32.totalorder %s18, 3
      %p53 = por %p51, %p52
      %p55 = scmp.ne.s32.totalorder %s38, %s54
      %p56 = scmp.eq.s32.totalorder %s18, 0
      %p57 = por %p55, %p56
      %s58 = ssub.s32 %s20, %s27
      %p59 = scmp.eq.s32.totalorder %s58, 0
      %s61 = sadd.s32 %s60, 1
      %s62 = scalar_select %p59, %s60, %s61
      %p65 = pneg %p59
      %p66 = scmp.eq.s32.totalorder %s12, 3
      %p67 = por %p65, %p66
      %p68 = scmp.ne.s32.totalorder %s60, %s63
      %p69 = scmp.eq.s32.totalorder %s12, 0
      %p70 = por %p68, %p69
      %p71 = scmp.ne.s32.totalorder %s60, %s63
      %p72 = scmp.eq.s32.totalorder %s17, 3
      %p73 = por %p71, %p72
      %p74 = scmp.ne.s32.totalorder %s63, %s64
      %p75 = scmp.eq.s32.totalorder %s17, 0
      %p76 = por %p74, %p75
      %p77 = scmp.ne.s32.totalorder %s63, %s64
      %p78 = scmp.eq.s32.totalorder %s18, 3
      %p79 = por %p77, %p78
      %p81 = scmp.ne.s32.totalorder %s64, %s80
      %p82 = scmp.eq.s32.totalorder %s18, 0
      %p83 = por %p81, %p82
      %s84 = ssub.s32 %s19, %s31
      %p85 = scmp.eq.s32.totalorder %s84, 0
      %s87 = sadd.s32 %s86, 1
      %s88 = scalar_select %p85, %s86, %s87
      %p91 = pneg %p85
      %p92 = scmp.eq.s32.totalorder %s12, 3
      %p93 = por %p91, %p92
      %p94 = scmp.ne.s32.totalorder %s86, %s89
      %p95 = scmp.eq.s32.totalorder %s12, 0
      %p96 = por %p94, %p95
      %p97 = scmp.ne.s32.totalorder %s86, %s89
      %p98 = scmp.eq.s32.totalorder %s17, 3
      %p99 = por %p97, %p98
      %p100 = scmp.ne.s32.totalorder %s89, %s90
      %p101 = scmp.eq.s32.totalorder %s17, 0
      %p102 = por %p100, %p101
      %p103 = scmp.ne.s32.totalorder %s89, %s90
      %p104 = scmp.eq.s32.totalorder %s18, 3
      %p105 = por %p103, %p104
      %p107 = scmp.ne.s32.totalorder %s90, %s106
      %p108 = scmp.eq.s32.totalorder %s18, 0
      %p109 = por %p107, %p108
      %s110 = ssub.s32 %s19, %s31
      %s111 = ssub.s32 %s20, %s27
      %s112 = sor.u32 %s110, %s111
      %p113 = scmp.eq.s32.totalorder %s112, 0
      %s115 = sadd.s32 %s114, 1
      %s116 = scalar_select %p113, %s114, %s115
      %p119 = pneg %p113
      %p120 = scmp.eq.s32.totalorder %s12, 3
      %p121 = por %p119, %p120
      %p122 = scmp.ne.s32.totalorder %s114, %s117
      %p123 = scmp.eq.s32.totalorder %s12, 0
      %p124 = por %p122, %p123
      %p125 = scmp.ne.s32.totalorder %s114, %s117
      %p126 = scmp.eq.s32.totalorder %s17, 3
      %p127 = por %p125, %p126
      %p128 = scmp.ne.s32.totalorder %s117, %s118
      %p129 = scmp.eq.s32.totalorder %s17, 0
      %p130 = por %p128, %p129
      %p131 = scmp.ne.s32.totalorder %s117, %s118
      %p132 = scmp.eq.s32.totalorder %s18, 3
      %p133 = por %p131, %p132
      %p135 = scmp.ne.s32.totalorder %s118, %s134
      %p136 = scmp.eq.s32.totalorder %s18, 0
      %p137 = por %p135, %p136
      %s138 = ssub.s32 %s19, %s31
      %p139 = scmp.eq.s32.totalorder %s138, 0
      %s141 = sadd.s32 %s140, 1
      %s142 = scalar_select %p139, %s140, %s141
      %p145 = pneg %p139
      %p146 = scmp.eq.s32.totalorder %s12, 3
      %p147 = por %p145, %p146
      %p148 = scmp.ne.s32.totalorder %s140, %s143
      %p149 = scmp.eq.s32.totalorder %s12, 0
      %p150 = por %p148, %p149
      %p151 = scmp.ne.s32.totalorder %s140, %s143
      %p152 = scmp.eq.s32.totalorder %s17, 3
      %p153 = por %p151, %p152
      %p154 = scmp.ne.s32.totalorder %s143, %s144
      %p155 = scmp.eq.s32.totalorder %s17, 0
      %p156 = por %p154, %p155
      %p157 = scmp.ne.s32.totalorder %s143, %s144
      %p158 = scmp.eq.s32.totalorder %s18, 3
      %p159 = por %p157, %p158
      %p161 = scmp.ne.s32.totalorder %s144, %s160
      %p162 = scmp.eq.s32.totalorder %s18, 0
      %p163 = por %p161, %p162
      %s164 = ssub.s32 %s19, %s31
      %p165 = scmp.eq.s32.totalorder %s164, 0
      %s167 = sadd.s32 %s166, 1
      %s168 = scalar_select %p165, %s166, %s167
      %p171 = pneg %p165
      %p172 = scmp.eq.s32.totalorder %s12, 3
      %p173 = por %p171, %p172
      %p174 = scmp.ne.s32.totalorder %s166, %s169
      %p175 = scmp.eq.s32.totalorder %s12, 0
      %p176 = por %p174, %p175
      %p177 = scmp.ne.s32.totalorder %s166, %s169
      %p178 = scmp.eq.s32.totalorder %s17, 3
      %p179 = por %p177, %p178
      %p180 = scmp.ne.s32.totalorder %s169, %s170
      %p181 = scmp.eq.s32.totalorder %s17, 0
      %p182 = por %p180, %p181
      %p183 = scmp.ne.s32.totalorder %s169, %s170
      %p184 = scmp.eq.s32.totalorder %s18, 3
      %p185 = por %p183, %p184
      %p187 = scmp.ne.s32.totalorder %s170, %s186
      %p188 = scmp.eq.s32.totalorder %s18, 0
      %p189 = por %p187, %p188
      %p190 = scmp.le.s32.totalorder 1, %s12
      %p191 = scmp.lt.s32.totalorder %s12, 5
      %p192 = pnand %p190, %p191
      %p193 = pneg %p192
      // Predicated region
      $region9: #{policy_head.1} parent=5 // pred_check
        _
      $region10: #{policy_head.1} parent=5 // pred_check_branch
        %195 = sbr.rel (%p192) target = $region12
      $region11: #{policy_head.1} parent=5 // pred_region
        %s196 = ssub.s32 %s12, 1
      $region12: #{policy_head.1} parent=5 // pred_fallthru
        _
      %p197 = scmp.lt.s32.totalorder %s12, 4
      // Predicated region
      $region13: #{policy_head.1} parent=5 // pred_check
        %p198 = pneg %p197
      $region14: #{policy_head.1} parent=5 // pred_check_branch
        %200 = sbr.rel (%p198) target = $region16
      $region15: #{policy_head.1} parent=5 // pred_region
        // Predicated region
        $region17: #{policy_head.1} parent=15 // pred_check
          %p201 = pneg %p44
        $region18: #{policy_head.1} parent=15 // pred_check_branch
          %203 = sbr.rel (%p201) target = $region20
        $region19: #{policy_head.1} parent=15 // pred_region
          %s204 = smul.u32 2, %s19
          %p205 = scmp.lt.s32.totalorder %s204, 3
          %s206 = scalar_select %p205, %s204, 3
          %s207 = smul.addr %s206, 4
          %s208 = scalar_lea.vmem %s0, %s207
          %s209 = smul.u32 2, %s19
        $region20: #{policy_head.1} parent=15 // pred_fallthru
          _
        // Predicated region
        $region21: #{policy_head.1} parent=15 // pred_check
          %p210 = pneg %p70
        $region22: #{policy_head.1} parent=15 // pred_check_branch
          %212 = sbr.rel (%p210) target = $region24
        $region23: #{policy_head.1} parent=15 // pred_region
          %s213 = sand.u32 %s60, 1
          %s214 = sand.u32 %s60, 1
          %s215 = smul.addr %s214, 16
          %s216 = scalar_lea.vmem [#allocation6], %s215
          %s217 = smul.addr %s20, 4
          %s218 = scalar_lea.vmem %s1, %s217
          // Predicated region
          $region25: #{policy_head.1} parent=23 // pred_check
            _
          $region26: #{policy_head.1} parent=23 // pred_check_branch
            %220 = sbr.rel (0) target = $region28
          $region27: #{policy_head.1} parent=23 // pred_region
            // Predicated region
            $region29: #{policy_head.1} parent=27 // pred_check
              _
            $region30: #{policy_head.1} parent=27 // pred_check_branch
              %222 = sbr.rel target = $region32
            $region31: #{policy_head.1} parent=27 // pred_region
              // Predicated region
              $region44: #{policy_head.1} parent=31 // pred_check
                _
              $region45: #{policy_head.1} parent=31 // pred_check_branch
                %243 = sbr.rel (0) target = $region47
              $region46: #{policy_head.1} parent=31 // pred_region
                loop: start=0, step=1, limit=1
                $region48: #{policy_head.1} parent=46 // loop_pre_header
                  _
                $region49: #{policy_head.1} parent=46 // loop_header
                  %s245 = sphi 0, %s249
                  %p246 = scmp.ge.s32.totalorder %s245, 1
                  %s250 = sphi %s218, %s218
                  %s251 = sphi %s216, %s216
                $region50: #{policy_head.1} parent=46 // loop_header_branch
                  %248 = sbr.rel (%p246) target = $region54
                $region51: #{policy_head.1} parent=46 // loop_body
                  _
                $region52: #{policy_head.1} parent=46 // loop_footer
                  %s249 = sadd.s32 1, %s245
                $region53: #{policy_head.1} parent=46 // loop_footer_branch
                  %244 = sbr.rel target = $region49
                $region54: #{policy_head.1} parent=46 // loop_exit
                  _
                loop: start=0, step=1, limit=1
                $region55: #{policy_head.1} parent=46 // loop_pre_header
                  _
                $region56: #{policy_head.1} parent=46 // loop_header
                  %s254 = sphi 0, %s258
                  %p255 = scmp.ge.s32.totalorder %s254, 1
                  %s259 = sphi %s218, %s218
                  %s260 = sphi %s216, %s216
                $region57: #{policy_head.1} parent=46 // loop_header_branch
                  %257 = sbr.rel (%p255) target = $region61
                $region58: #{policy_head.1} parent=46 // loop_body
                  %v261 = vld [vmem:[%s259] sm:$0xf]
                  %262 = vst [vmem:[%s260] sm:$0xf] %v261
                  %v263 = vld [vmem:[%s259 + $0x8] sm:$0xf]
                  %264 = vst [vmem:[%s260 + $0x4] sm:$0xf] %v263
                  %v265 = vld [vmem:[%s259 + $0x10] sm:$0xf]
                  %266 = vst [vmem:[%s260 + $0x8] sm:$0xf] %v265
                  %v267 = vld [vmem:[%s259 + $0x18] sm:$0xf]
                  %268 = vst [vmem:[%s260 + $0xc] sm:$0xf] %v267
                $region59: #{policy_head.1} parent=46 // loop_footer
                  %s258 = sadd.s32 1, %s254
                $region60: #{policy_head.1} parent=46 // loop_footer_branch
                  %253 = sbr.rel target = $region56
                $region61: #{policy_head.1} parent=46 // loop_exit
                  _
              $region47: #{policy_head.1} parent=31 // pred_fallthru
                _
            $region32: #{policy_head.1} parent=27 // pred_fallthru
              _
            // Predicated region
            $region33: #{policy_head.1} parent=27 // pred_check
              _
            $region34: #{policy_head.1} parent=27 // pred_check_branch
              %224 = sbr.rel (0) target = $region36
            $region35: #{policy_head.1} parent=27 // pred_region
              loop: start=0, step=1, limit=1
              $region37: #{policy_head.1} parent=35 // loop_pre_header
                _
              $region38: #{policy_head.1} parent=35 // loop_header
                %s227 = sphi 0, %s231
                %p228 = scmp.ge.s32.totalorder %s227, 1
                %s232 = sphi %s218, %s218
                %s233 = sphi %s216, %s216
              $region39: #{policy_head.1} parent=35 // loop_header_branch
                %230 = sbr.rel (%p228) target = $region43
              $region40: #{policy_head.1} parent=35 // loop_body
                %v234 = vld [vmem:[%s232] sm:$0xf]
                %235 = vst [vmem:[%s233] sm:$0xf] %v234
                %v236 = vld [vmem:[%s232 + $0x8] sm:$0xf]
                %237 = vst [vmem:[%s233 + $0x4] sm:$0xf] %v236
                %v238 = vld [vmem:[%s232 + $0x10] sm:$0xf]
                %239 = vst [vmem:[%s233 + $0x8] sm:$0xf] %v238
                %v240 = vld [vmem:[%s232 + $0x18] sm:$0xf]
                %241 = vst [vmem:[%s233 + $0xc] sm:$0xf] %v240
              $region41: #{policy_head.1} parent=35 // loop_footer
                %s231 = sadd.s32 1, %s227
              $region42: #{policy_head.1} parent=35 // loop_footer_branch
                %226 = sbr.rel target = $region38
              $region43: #{policy_head.1} parent=35 // loop_exit
                _
            $region36: #{policy_head.1} parent=27 // pred_fallthru
              _
          $region28: #{policy_head.1} parent=23 // pred_fallthru
            _
          %269 = vnop
        $region24: #{policy_head.1} parent=15 // pred_fallthru
          _
        // Predicated region
        $region62: #{policy_head.1} parent=15 // pred_check
          %p270 = pneg %p96
        $region63: #{policy_head.1} parent=15 // pred_check_branch
          %272 = sbr.rel (%p270) target = $region65
        $region64: #{policy_head.1} parent=15 // pred_region
          %s273 = smul.u32 2, %s19
          %p274 = scmp.lt.s32.totalorder %s273, 3
          %s275 = scalar_select %p274, %s273, 3
          %s276 = smul.addr %s275, 8
          %s277 = scalar_lea.vmem %s2, %s276
          %s278 = smul.u32 2, %s19
        $region65: #{policy_head.1} parent=15 // pred_fallthru
          _
      $region16: #{policy_head.1} parent=5 // pred_fallthru
        _
      %p279 = scmp.le.s32.totalorder 1, %s12
      %p280 = scmp.lt.s32.totalorder %s12, 5
      %p281 = pnand %p279, %p280
      %p282 = pneg %p281
      // Predicated region
      $region66: #{policy_head.1} parent=5 // pred_check
        _
      $region67: #{policy_head.1} parent=5 // pred_check_branch
        %284 = sbr.rel (%p281) target = $region69
      $region68: #{policy_head.1} parent=5 // pred_region
        %s285 = ssub.s32 %s12, 1
        %s286 = sand.u32 %s63, 1
        %s287 = sand.u32 %s63, 1
        %s288 = smul.addr %s287, 16
        %s289 = scalar_lea.vmem [#allocation6], %s288
        // Predicated region
        $region70: #{policy_head.1} parent=68 // pred_check
          %p290 = pneg %p76
        $region71: #{policy_head.1} parent=68 // pred_check_branch
          %292 = sbr.rel (%p290) target = $region73
        $region72: #{policy_head.1} parent=68 // pred_region
          _
        $region73: #{policy_head.1} parent=68 // pred_fallthru
          _
        %s293 = smul.u32 2, %s21
        %p294 = scmp.lt.s32.totalorder %s293, 3
        %s295 = scalar_select %p294, %s293, 3
        %s296 = smul.addr %s295, 4
        %s297 = scalar_lea.vmem %s0, %s296
        %p298 = pneg %p50
        %p299 = pneg %p47
        %s300 = sand.u32 %s63, 1
        %s301 = sand.u32 %s63, 1
        %s302 = smul.addr %s301, 16
        %s303 = scalar_lea.vmem [#allocation6], %s302
        %p304 = pneg %p76
        %p305 = pneg %p73
        %s306 = smul.u32 2, %s21
        %p307 = scmp.lt.s32.totalorder %s306, 3
        %s308 = scalar_select %p307, %s306, 3
        %s309 = smul.addr %s308, 8
        %s310 = scalar_lea.vmem %s2, %s309
        %p311 = pneg %p102
        %p312 = pneg %p99
        %p313 = pneg %p130
        %p314 = pneg %p127
        %s315 = sand.u32 %s117, 1
        %s316 = sand.u32 %s117, 1
        %s317 = smul.addr %s316, 8
        %s318 = scalar_lea.vmem [#allocation7], %s317
        %p319 = pneg %p156
        %p320 = pneg %p153
        %s321 = smul.u32 2, %s21
        %p322 = scmp.lt.s32.totalorder %s321, 3
        %s323 = scalar_select %p322, %s321, 3
        %s324 = smul.addr %s323, 8
        %s325 = scalar_lea.vmem %s4, %s324
        %p326 = pneg %p182
        %p327 = pneg %p179
        %s328 = smul.u32 2, %s21
        %p329 = scmp.lt.s32.totalorder %s328, 3
        %s330 = scalar_select %p329, %s328, 3
        %s331 = smul.addr %s330, 8
        %s332 = scalar_lea.vmem %s5, %s331
        %s333 = smul.u32 2, %s21
        %p334 = scmp.lt.s32.totalorder %s333, 3
        %s335 = scalar_select %p334, %s333, 3
        %s336 = smul.addr %s335, 4
        %s337 = scalar_lea.vmem %s0, %s336
        %s338 = smul.u32 2, %s21
        %s339 = smul.u32 2, %s21
        %p340 = scmp.lt.s32.totalorder %s339, 3
        %s341 = scalar_select %p340, %s339, 3
        %s342 = smul.addr %s341, 8
        %s343 = scalar_lea.vmem %s2, %s342
        %s344 = smul.u32 2, %s21
        %s345 = smul.u32 2, %s21
        %s346 = smul.u32 2, %s21
        %p347 = scmp.lt.s32.totalorder %s346, 3
        %s348 = scalar_select %p347, %s346, 3
        %s349 = smul.addr %s348, 8
        %s350 = scalar_lea.vmem %s4, %s349
        %s351 = smul.u32 2, %s21
        %s352 = smul.u32 2, %s21
        %p353 = scmp.lt.s32.totalorder %s352, 3
        %s354 = scalar_select %p353, %s352, 3
        %s355 = smul.addr %s354, 8
        %s356 = scalar_lea.vmem %s5, %s355
        %s357 = smul.u32 2, %s21
        %p359 = scmp.eq.s32.totalorder %s22, 0
        // Predicated region
        $region74: #{policy_head.1} parent=68 // pred_check
          %p360 = pneg %p359
        $region75: #{policy_head.1} parent=68 // pred_check_branch
          %362 = sbr.rel (%p360) target = $region77
        $region76: #{policy_head.1} parent=68 // pred_region
          %vm363 = vcmask 7168
          %364 = vst.msk [vmem:[#allocation2] sm:$0xff] %vm363, -1e+30
          %365 = vst.msk [vmem:[#allocation2 + $0x8] sm:$0xff] %vm363, -1e+30
          %366 = vst.msk [vmem:[#allocation3] sm:$0xff] %vm363, 0.0
          %367 = vst.msk [vmem:[#allocation3 + $0x8] sm:$0xff] %vm363, 0.0
          %368 = vst.msk [vmem:[#allocation4] sm:$0xff] %vm363, 0.0
          %369 = vst.msk [vmem:[#allocation4 + $0x8] sm:$0xff] %vm363, 0.0
          %370 = vst.msk [vmem:[#allocation5] sm:$0xff] %vm363, 0.0
          %371 = vst.msk [vmem:[#allocation5 + $0x8] sm:$0xff] %vm363, 0.0
        $region77: #{policy_head.1} parent=68 // pred_fallthru
          _
        %v372 = vld [vmem:[%s337] sm:$0xf]
        %v373 = vld [vmem:[%s337 + $0x4] sm:$0xf]
        %v374 = vld [vmem:[%s289] sm:$0xf]
        %v375 = vld [vmem:[%s289 + $0x4] sm:$0xf]
        %v376 = vld [vmem:[%s289 + $0x8] sm:$0xf]
        %v377 = vld [vmem:[%s289 + $0xc] sm:$0xf]
        %v380 = vunpack.c.l.b16 %v372
        %v381 = vunpack.c.l.b16 %v373
        %v382 = vpack.c.b16 %v381, %v380
        %v387 = vunpack.c.l.b16 %v374
        %v388 = vunpack.c.l.b16 %v375
        %v389 = vunpack.c.l.b16 %v376
        %v390 = vunpack.c.l.b16 %v377
        %v391 = vpack.c.b16 %v388, %v387
        %v392 = vpack.c.b16 %v390, %v389
        %vm395 = vcmask 261120
        %v397 = vsel %vm395, %v382, 0
        %399 = vmatprep.subr.bf16.mxu0 0
        %400 = vmatpush1.bf16.msra.mxu0 %v391
        %401 = vmatprep.subr.bf16.mxu0 0
        %402 = vmatpush1.bf16.msra.mxu0 %v392
        %403 = vmatprep.subr.bf16.mxu0 0
        %404 = vmatpush1.bf16.msra.mxu0 0
        %405 = vmatprep.subr.bf16.mxu0 0
        %406 = vmatpush1.bf16.msra.mxu0 0
        %407 = vmatprep.subr.bf16.mxu0 0
        %408 = vmatpush1.bf16.msra.mxu0 0
        %409 = vmatprep.subr.bf16.mxu0 0
        %410 = vmatpush1.bf16.msra.mxu0 0
        %411 = vmatprep.subr.bf16.mxu0 0
        %412 = vmatpush1.bf16.msra.mxu0 0
        %413 = vmatprep.subr.bf16.mxu0 0
        %414 = vmatpush1.bf16.msra.mxu0 0
        %415 = vmatprep.subr.bf16.mxu0 0
        %416 = vmatpush1.bf16.msra.mxu0 0
        %417 = vmatprep.subr.bf16.mxu0 0
        %418 = vmatpush1.bf16.msra.mxu0 0
        %419 = vmatprep.subr.bf16.mxu0 0
        %420 = vmatpush1.bf16.msra.mxu0 0
        %421 = vmatprep.subr.bf16.mxu0 0
        %422 = vmatpush1.bf16.msra.mxu0 0
        %423 = vmatprep.subr.bf16.mxu0 0
        %424 = vmatpush1.bf16.msra.mxu0 0
        %425 = vmatprep.subr.bf16.mxu0 0
        %426 = vmatpush1.bf16.msra.mxu0 0
        %427 = vmatprep.subr.bf16.mxu0 0
        %428 = vmatpush1.bf16.msra.mxu0 0
        %429 = vmatprep.subr.bf16.mxu0 0
        %430 = vmatpush1.bf16.msra.mxu0 0
        %431 = vmatprep.mubr.bf16.mxu0 0
        %432 = vmatmul.mubr.bf16.gmra.mrb[0].mxu0 %v397
        %v433 = vpop.f32.mrb[0].mxu0
        %v434 = vadd.f32 0.0, %v433
        %v435 = vpop.f32.mrb[0].mxu0
        %v436 = vpop.f32.mrb[0].mxu0
        %v437 = vadd.f32 0.0, %v436
        %v438 = vpop.f32.mrb[0].mxu0
        %439 = vdwg.mxu0
        %v440 = vpack.c.bf16 %v437, %v434
        %v442 = vunpack.c.l.b16 %v440
        %v443 = vunpack.c.h.b16 %v440
        %v444 = vpack.c.b16 %v442, %v442
        %v445 = vpack.c.b16 %v443, %v443
        %448 = vst [vmem:[%s318] sm:$0xf] %v444
        %449 = vst [vmem:[%s318 + $0x4] sm:$0xf] %v445
        %s450 = smul.u32 %s22, 128
        %v451 = vlaneseq
        %v452 = vand.u32 %v451, 127
        %v453 = vstv %s450
        %v454 = vadd.s32 %v453, %v452
        %v455 = vld [vmem:[#allocation2] sm:$0xff]
        %v456 = vld [vmem:[#allocation2 + $0x8] sm:$0xff]
        %v457 = vld [vmem:[#allocation3] sm:$0xff]
        %v458 = vld [vmem:[#allocation3 + $0x8] sm:$0xff]
        %v459 = vld [vmem:[#allocation4] sm:$0xff]
        %v460 = vld [vmem:[#allocation4 + $0x8] sm:$0xff]
        %461 = vmax.xlane.f32.xlu0 %v434
        %v462 = vpop.xlane.xlu0 %461
        %463 = vmax.xlane.f32.xlu0 %v437
        %v464 = vpop.xlane.xlu0 %463
        %v465 = vmax.f32 %v455, %v462
        %v466 = vmax.f32 %v456, %v464
        %v467 = vsub.f32 %v455, %v465
        %v468 = vsub.f32 %v456, %v466
        %v469 = vmul.f32 %v467, 1.442695
        %v470 = vpow.pop %v469
        %v471 = vmul.f32 %v468, 1.442695
        %v472 = vpow.pop %v471
        %474 = vset.pattern.permute.xlu0 0
        %475 = vperm.xlu0 %474, %v465
        %v476 = vpop.permute.xlu0 %475
        %479 = vset.pattern.permute.xlu0 0
        %480 = vperm.xlu0 %479, %v466
        %v481 = vpop.permute.xlu0 %480
        %v483 = vsub.f32 %v434, %v476
        %v484 = vsub.f32 %v437, %v481
        %v485 = vmul.f32 %v483, 1.442695
        %v486 = vpow.pop %v485
        %v487 = vmul.f32 %v484, 1.442695
        %v488 = vpow.pop %v487
        %vm489 = vcmask 7168
        %490 = vst.msk [vmem:[#allocation2] sm:$0xff] %vm489, %v465
        %491 = vst.msk [vmem:[#allocation2 + $0x8] sm:$0xff] %vm489, %v466
        %v492 = vmul.f32 %v470, %v457
        %v493 = vmul.f32 %v472, %v458
        %494 = vadd.xlane.f32.xlu0 %v486
        %v495 = vpop.xlane.xlu0 %494
        %496 = vadd.xlane.f32.xlu0 %v488
        %v497 = vpop.xlane.xlu0 %496
        %v498 = vadd.f32 %v492, %v495
        %v499 = vadd.f32 %v493, %v497
        %500 = vst.msk [vmem:[#allocation3] sm:$0xff] %vm489, %v498
        %501 = vst.msk [vmem:[#allocation3 + $0x8] sm:$0xff] %vm489, %v499
        %v502 = vmul.f32 %v467, %v457
        %v503 = vmul.f32 %v468, %v458
        %v504 = vadd.f32 %v459, %v502
        %v505 = vadd.f32 %v460, %v503
        %v506 = vmul.f32 %v470, %v504
        %v507 = vmul.f32 %v472, %v505
        %v508 = vmul.f32 %v486, %v483
        %v509 = vmul.f32 %v488, %v484
        %510 = vadd.xlane.f32.xlu0 %v508
        %v511 = vpop.xlane.xlu0 %510
        %512 = vadd.xlane.f32.xlu0 %v509
        %v513 = vpop.xlane.xlu0 %512
        %v514 = vadd.f32 %v506, %v511
        %v515 = vadd.f32 %v507, %v513
        %516 = vst.msk [vmem:[#allocation4] sm:$0xff] %vm489, %v514
        %517 = vst.msk [vmem:[#allocation4 + $0x8] sm:$0xff] %vm489, %v515
        %v518 = vld [vmem:[%s343] sm:$0xff]
        %v519 = vld [vmem:[%s343 + $0x8] sm:$0xff]
        %v520 = vld [vmem:[#allocation5] sm:$0xff]
        %v521 = vld [vmem:[#allocation5 + $0x8] sm:$0xff]
        %522 = vset.pattern.permute.xlu0 0
        %523 = vperm.xlu0 %522, %v518
        %v524 = vpop.permute.xlu0 %523
        %525 = vset.pattern.permute.xlu0 0
        %526 = vperm.xlu0 %525, %v519
        %v527 = vpop.permute.xlu0 %526
        %vm528 = vcmp.eq.s32.totalorder %v454, %v524
        %vm529 = vcmp.eq.s32.totalorder %v454, %v527
        %v530 = vsel %vm528, %v434, 0.0
        %v531 = vsel %vm529, %v437, 0.0
        %532 = vadd.xlane.f32.xlu0 %v530
        %v533 = vpop.xlane.xlu0 %532
        %534 = vadd.xlane.f32.xlu0 %v531
        %v535 = vpop.xlane.xlu0 %534
        %v536 = vadd.f32 %v520, %v533
        %v537 = vadd.f32 %v521, %v535
        %538 = vst.msk [vmem:[#allocation5] sm:$0xff] %vm489, %v536
        %539 = vst.msk [vmem:[#allocation5 + $0x8] sm:$0xff] %vm489, %v537
        %p540 = scmp.eq.s32.totalorder %s22, 1
        // Predicated region
        $region78: #{policy_head.1} parent=68 // pred_check
          %p541 = pneg %p540
        $region79: #{policy_head.1} parent=68 // pred_check_branch
          %543 = sbr.rel (%p541) target = $region81
        $region80: #{policy_head.1} parent=68 // pred_region
          %v544 = vld [vmem:[#allocation3] sm:$0xff]
          %v545 = vld [vmem:[#allocation3 + $0x8] sm:$0xff]
          %v546 = vlog2.pop %v544
          %v547 = vmul.f32 %v546, 0.6931472
          %v548 = vlog2.pop %v545
          %v549 = vmul.f32 %v548, 0.6931472
          %v550 = vrcp.pop %v544
          %v551 = vrcp.pop %v545
          %v552 = vld [vmem:[#allocation4] sm:$0xff]
          %v553 = vld [vmem:[#allocation4 + $0x8] sm:$0xff]
          %v554 = vmul.f32 %v552, %v550
          %v555 = vmul.f32 %v553, %v551
          %v556 = vsub.f32 %v547, %v554
          %v557 = vsub.f32 %v549, %v555
          %v558 = vld [vmem:[#allocation5] sm:$0xff]
          %v559 = vld [vmem:[#allocation5 + $0x8] sm:$0xff]
          %v560 = vld [vmem:[#allocation2] sm:$0xff]
          %v561 = vld [vmem:[#allocation2 + $0x8] sm:$0xff]
          %v562 = vadd.f32 %v560, %v547
          %v563 = vadd.f32 %v561, %v549
          %v564 = vsub.f32 %v558, %v562
          %v565 = vsub.f32 %v559, %v563
          %567 = vset.pattern.permute.xlu0 0
          %568 = vperm.xlu0 %567, %v556
          %v569 = vpop.permute.xlu0 %568
          %572 = vset.pattern.permute.xlu0 0
          %573 = vperm.xlu0 %572, %v557
          %v574 = vpop.permute.xlu0 %573
          %576 = vst [vmem:[%s356] sm:$0xff] %v569
          %577 = vst [vmem:[%s356 + $0x8] sm:$0xff] %v574
          %579 = vset.pattern.permute.xlu0 0
          %580 = vperm.xlu0 %579, %v564
          %v581 = vpop.permute.xlu0 %580
          %584 = vset.pattern.permute.xlu0 0
          %585 = vperm.xlu0 %584, %v565
          %v586 = vpop.permute.xlu0 %585
          %588 = vst [vmem:[%s350] sm:$0xff] %v581
          %589 = vst [vmem:[%s350 + $0x8] sm:$0xff] %v586
        $region81: #{policy_head.1} parent=68 // pred_fallthru
          _
        %s590 = sand.u32 %s117, 1
        %s591 = sand.u32 %s117, 1
        %s592 = smul.addr %s591, 8
        %s593 = scalar_lea.vmem [#allocation7], %s592
        %s594 = smul.u32 2, %s21
        %p595 = scmp.lt.s32.totalorder %s594, 3
        %s596 = scalar_select %p595, %s594, 3
        %s597 = smul.addr %s596, 8
        %s598 = scalar_lea.vmem %s4, %s597
        %s599 = smul.u32 2, %s21
        %p600 = scmp.lt.s32.totalorder %s599, 3
        %s601 = scalar_select %p600, %s599, 3
        %s602 = smul.addr %s601, 8
        %s603 = scalar_lea.vmem %s5, %s602
        // Predicated region
        $region82: #{policy_head.1} parent=68 // pred_check
          %p604 = pneg %p127
        $region83: #{policy_head.1} parent=68 // pred_check_branch
          %606 = sbr.rel (%p604) target = $region85
        $region84: #{policy_head.1} parent=68 // pred_region
          %s607 = smul.u32 2, %s21
          %s608 = smul.addr %s607, 2
          %s609 = sadd.s32 %s22, %s608
          %s610 = smul.addr %s609, 4
          %s611 = scalar_lea.vmem %s3, %s610
          // Predicated region
          $region86: #{policy_head.1} parent=84 // pred_check
            _
          $region87: #{policy_head.1} parent=84 // pred_check_branch
            %613 = sbr.rel (0) target = $region89
          $region88: #{policy_head.1} parent=84 // pred_region
            // Predicated region
            $region90: #{policy_head.1} parent=88 // pred_check
              _
            $region91: #{policy_head.1} parent=88 // pred_check_branch
              %615 = sbr.rel target = $region93
            $region92: #{policy_head.1} parent=88 // pred_region
              // Predicated region
              $region105: #{policy_head.1} parent=92 // pred_check
                _
              $region106: #{policy_head.1} parent=92 // pred_check_branch
                %632 = sbr.rel (0) target = $region108
              $region107: #{policy_head.1} parent=92 // pred_region
                loop: start=0, step=1, limit=1
                $region109: #{policy_head.1} parent=107 // loop_pre_header
                  _
                $region110: #{policy_head.1} parent=107 // loop_header
                  %s634 = sphi 0, %s638
                  %p635 = scmp.ge.s32.totalorder %s634, 1
                  %s639 = sphi %s593, %s593
                  %s640 = sphi %s611, %s611
                $region111: #{policy_head.1} parent=107 // loop_header_branch
                  %637 = sbr.rel (%p635) target = $region115
                $region112: #{policy_head.1} parent=107 // loop_body
                  _
                $region113: #{policy_head.1} parent=107 // loop_footer
                  %s638 = sadd.s32 1, %s634
                $region114: #{policy_head.1} parent=107 // loop_footer_branch
                  %633 = sbr.rel target = $region110
                $region115: #{policy_head.1} parent=107 // loop_exit
                  _
                loop: start=0, step=1, limit=1
                $region116: #{policy_head.1} parent=107 // loop_pre_header
                  _
                $region117: #{policy_head.1} parent=107 // loop_header
                  %s643 = sphi 0, %s647
                  %p644 = scmp.ge.s32.totalorder %s643, 1
                  %s648 = sphi %s593, %s593
                  %s649 = sphi %s611, %s611
                $region118: #{policy_head.1} parent=107 // loop_header_branch
                  %646 = sbr.rel (%p644) target = $region122
                $region119: #{policy_head.1} parent=107 // loop_body
                  %v650 = vld [vmem:[%s648] sm:$0xf]
                  %651 = vst [vmem:[%s649] sm:$0xf] %v650
                  %v652 = vld [vmem:[%s648 + $0x4] sm:$0xf]
                  %653 = vst [vmem:[%s649 + $0x8] sm:$0xf] %v652
                $region120: #{policy_head.1} parent=107 // loop_footer
                  %s647 = sadd.s32 1, %s643
                $region121: #{policy_head.1} parent=107 // loop_footer_branch
                  %642 = sbr.rel target = $region117
                $region122: #{policy_head.1} parent=107 // loop_exit
                  _
              $region108: #{policy_head.1} parent=92 // pred_fallthru
                _
            $region93: #{policy_head.1} parent=88 // pred_fallthru
              _
            // Predicated region
            $region94: #{policy_head.1} parent=88 // pred_check
              _
            $region95: #{policy_head.1} parent=88 // pred_check_branch
              %617 = sbr.rel (0) target = $region97
            $region96: #{policy_head.1} parent=88 // pred_region
              loop: start=0, step=1, limit=1
              $region98: #{policy_head.1} parent=96 // loop_pre_header
                _
              $region99: #{policy_head.1} parent=96 // loop_header
                %s620 = sphi 0, %s624
                %p621 = scmp.ge.s32.totalorder %s620, 1
                %s625 = sphi %s593, %s593
                %s626 = sphi %s611, %s611
              $region100: #{policy_head.1} parent=96 // loop_header_branch
                %623 = sbr.rel (%p621) target = $region104
              $region101: #{policy_head.1} parent=96 // loop_body
                %v627 = vld [vmem:[%s625] sm:$0xf]
                %628 = vst [vmem:[%s626] sm:$0xf] %v627
                %v629 = vld [vmem:[%s625 + $0x4] sm:$0xf]
                %630 = vst [vmem:[%s626 + $0x8] sm:$0xf] %v629
              $region102: #{policy_head.1} parent=96 // loop_footer
                %s624 = sadd.s32 1, %s620
              $region103: #{policy_head.1} parent=96 // loop_footer_branch
                %619 = sbr.rel target = $region99
              $region104: #{policy_head.1} parent=96 // loop_exit
                _
            $region97: #{policy_head.1} parent=88 // pred_fallthru
              _
          $region89: #{policy_head.1} parent=84 // pred_fallthru
            _
          %654 = vnop
        $region85: #{policy_head.1} parent=68 // pred_fallthru
          _
        // Predicated region
        $region123: #{policy_head.1} parent=68 // pred_check
          %p655 = pneg %p153
        $region124: #{policy_head.1} parent=68 // pred_check_branch
          %657 = sbr.rel (%p655) target = $region126
        $region125: #{policy_head.1} parent=68 // pred_region
          %s658 = smul.u32 2, %s21
        $region126: #{policy_head.1} parent=68 // pred_fallthru
          _
        // Predicated region
        $region127: #{policy_head.1} parent=68 // pred_check
          %p659 = pneg %p179
        $region128: #{policy_head.1} parent=68 // pred_check_branch
          %661 = sbr.rel (%p659) target = $region130
        $region129: #{policy_head.1} parent=68 // pred_region
          %s662 = smul.u32 2, %s21
        $region130: #{policy_head.1} parent=68 // pred_fallthru
          _
      $region69: #{policy_head.1} parent=5 // pred_fallthru
        _
      %p663 = scmp.le.s32.totalorder 2, %s12
      // Predicated region
      $region131: #{policy_head.1} parent=5 // pred_check
        %p664 = pneg %p663
      $region132: #{policy_head.1} parent=5 // pred_check_branch
        %666 = sbr.rel (%p664) target = $region134
      $region133: #{policy_head.1} parent=5 // pred_region
        %s667 = ssub.s32 %s12, 2
        // Predicated region
        $region135: #{policy_head.1} parent=133 // pred_check
          %p668 = pneg %p133
        $region136: #{policy_head.1} parent=133 // pred_check_branch
          %670 = sbr.rel (%p668) target = $region138
        $region137: #{policy_head.1} parent=133 // pred_region
          %s671 = sand.u32 %s118, 1
          %s672 = sand.u32 %s118, 1
          %s673 = smul.addr %s672, 8
          %s674 = scalar_lea.vmem [#allocation7], %s673
        $region138: #{policy_head.1} parent=133 // pred_fallthru
          _
        // Predicated region
        $region139: #{policy_head.1} parent=133 // pred_check
          %p675 = pneg %p159
        $region140: #{policy_head.1} parent=133 // pred_check_branch
          %677 = sbr.rel (%p675) target = $region142
        $region141: #{policy_head.1} parent=133 // pred_region
          %s678 = smul.u32 2, %s23
          %p679 = scmp.lt.s32.totalorder %s678, 3
          %s680 = scalar_select %p679, %s678, 3
          %s681 = smul.addr %s680, 8
          %s682 = scalar_lea.vmem %s4, %s681
        $region142: #{policy_head.1} parent=133 // pred_fallthru
          _
        // Predicated region
        $region143: #{policy_head.1} parent=133 // pred_check
          %p683 = pneg %p185
        $region144: #{policy_head.1} parent=133 // pred_check_branch
          %685 = sbr.rel (%p683) target = $region146
        $region145: #{policy_head.1} parent=133 // pred_region
          %s686 = smul.u32 2, %s23
          %p687 = scmp.lt.s32.totalorder %s686, 3
          %s688 = scalar_select %p687, %s686, 3
          %s689 = smul.addr %s688, 8
          %s690 = scalar_lea.vmem %s5, %s689
        $region146: #{policy_head.1} parent=133 // pred_fallthru
          _
      $region134: #{policy_head.1} parent=5 // pred_fallthru
        _
    $region6: #{policy_head.1} parent=1 // loop_footer
      %s16 = sadd.s32 1, %s12
    $region7: #{policy_head.1} parent=1 // loop_footer_branch
      %11 = sbr.rel target = $region3
    $region8: #{policy_head.1} parent=1 // loop_exit
      _

</llo_original>
